<compile_context>
chip_gen: v7x
topology: tpu7x:2x2x1
jax: 0.10.0
libtpu: 0.0.40
codegen_flags: <defaults>
</compile_context>

<pallas_src>
import numpy as np
import jax
import jax.numpy as jnp
from jax import lax
from jax.experimental import pallas as pl
from jax.experimental.pallas import tpu as pltpu

# ----------------------------- static configuration -------------------------
B = 2
IN_CH = 4
OUT_CH = 8
H = W = 16
HW = H * W
C_RATIO = 0.5
GROUPS = 2
L_CH = int(IN_CH * C_RATIO)      # 2  (passthrough channels)
R_CH = IN_CH - L_CH              # 2  (processed-branch input channels)
RO = OUT_CH - L_CH               # 6  (processed-branch output channels)
M = B * RO                       # 12 (batch folded into matmul M)
KH = KW = 3
K = KH * KW
PAD = 1
EPS = 1e-5                       # PyTorch BatchNorm2d default

# channel shuffle (groups=2): new channel j <- old channel _PERM[j]
if OUT_CH % GROUPS == 0:
    _PERM = [(j % GROUPS) * (OUT_CH // GROUPS) + j // GROUPS for j in range(OUT_CH)]
else:                            # PyTorch shuffle_chnls is a no-op in this case
    _PERM = list(range(OUT_CH))
_INV = [0] * OUT_CH              # old channel c is stored at new position _INV[c]
for _j, _old in enumerate(_PERM):
    _INV[_old] = _j


# ------------------ per-tap boundary masks for the depthwise conv ------------
def _tap_masks():
    """mask[k, p] = 1 iff output pixel p has a valid (non-padded) source at tap k."""
    m = np.zeros((K, HW), np.float32)
    for k in range(K):
        di, dj = k // KW - PAD, k % KW - PAD
        for pr in range(H):
            for pc in range(W):
                if 0 <= pr + di < H and 0 <= pc + dj < W:
                    m[k, pr * W + pc] = 1.0
    return jnp.asarray(m)


_MASKS = _tap_masks()            # [K, HW] f32 = 9 KB


# --------------------------------- kernel -----------------------------------
def _basic_unit_kernel(xl_ref, xr_ref, w1_ref, b1_ref, wdw_ref, bdw_ref,
                       w3_ref, b3_ref, mask_ref, out_ref):
    # conv1 (1x1) + folded BN + ReLU; batch folded into M via block-diagonal weights:
    #   [B*RO, B*R_CH] @ [B*R_CH, HW] -> [B*RO, HW]
    xr = xr_ref[...]
    y1 = jnp.dot(w1_ref[...], xr, preferred_element_type=jnp.float32) + b1_ref[...]
    y1 = jnp.maximum(y1, 0.0)

    # dwconv2: 3x3 depthwise (pad 1) as 9 lane rolls on the flattened spatial axis,
    # boundary-masked and FMA'd with per-channel tap weights.  Pure f32 VPU/XLU work.
    wdw = wdw_ref[...]                                   # [B*RO, K]
    acc = jnp.zeros_like(y1)
    for k in range(K):
        off = (k // KW - PAD) * W + (k % KW - PAD)       # flat spatial offset of tap k
        src = y1 if off == 0 else pltpu.roll(y1, shift=(-off) % HW, axis=1)
        acc = acc + (src * mask_ref[k:k + 1, :]) * wdw[:, k:k + 1]
    y2 = acc + bdw_ref[...]

    # conv3 (1x1) + folded BN + ReLU
    y3 = jnp.dot(w3_ref[...], y2, preferred_element_type=jnp.float32) + b3_ref[...]
    y3 = jnp.maximum(y3, 0.0)                            # [B*RO, HW]

    # fused concat(x_l, out_r) + channel shuffle: static row stores at the shuffled
    # channel positions -> full [B, OUT_CH, HW] written in-kernel (256 dense lanes).
    for b in range(B):
        for c in range(L_CH):
            dst = _INV[c]
            out_ref[b, dst:dst + 1, :] = xl_ref[b, c:c + 1, :]
        for r in range(RO):
            dst = _INV[L_CH + r]
            src_row = b * RO + r
            out_ref[b, dst:dst + 1, :] = y3[src_row:src_row + 1, :]


# --------------------------------- wrapper ----------------------------------
def _fold_bn(w2d, bn):
    """Fold inference-mode BatchNorm into a (bias-free) conv: w' = w*s, b' = beta - mean*s."""
    gamma, beta, mean, var = bn
    s = gamma / jnp.sqrt(var + EPS)
    return w2d * s[:, None], beta - mean * s


def basic_unit(x, w1, bn1, wdw, bn2, w3, bn3):
    """ShuffleNet-v2 BasicUnit forward. x: [B, IN_CH, H, W] -> [B, OUT_CH, H, W]."""
    x = x.astype(jnp.float32)
    x_l = x[:, :L_CH].reshape(B, L_CH, HW)               # passthrough branch
    x_r = x[:, L_CH:].reshape(B * R_CH, HW)               # processed branch, batch-stacked

    # fold BN into the conv weights / biases (pure parameter glue)
    w1f, b1f = _fold_bn(w1.reshape(RO, R_CH), bn1)         # [RO, R_CH], [RO]
    wdwf, bdwf = _fold_bn(wdw.reshape(RO, K), bn2)         # [RO, K],    [RO]
    w3f, b3f = _fold_bn(w3.reshape(RO, RO), bn3)           # [RO, RO],   [RO]

    # fold batch into the matmul M dimension: block-diagonal 1x1 weights, tiled biases
    eye = jnp.eye(B, dtype=jnp.float32)
    w1_bd = jnp.kron(eye, w1f)                             # [B*RO, B*R_CH]
    w3_bd = jnp.kron(eye, w3f)                             # [B*RO, B*RO]
    b1_bd = jnp.tile(b1f, B)[:, None]                      # [B*RO, 1]
    b3_bd = jnp.tile(b3f, B)[:, None]
    wdw_bd = jnp.tile(wdwf, (B, 1))                        # [B*RO, K]
    bdw_bd = jnp.tile(bdwf, B)[:, None]

    out = pl.pallas_call(
        _basic_unit_kernel,
        out_shape=jax.ShapeDtypeStruct((B, OUT_CH, HW), jnp.float32),
        grid_spec=pltpu.PrefetchScalarGridSpec(
            num_scalar_prefetch=0,
            grid=(1,),
            in_specs=[
                pl.BlockSpec((B, L_CH, HW), lambda i: (0, 0, 0)),      # x_l
                pl.BlockSpec((B * R_CH, HW), lambda i: (0, 0)),        # x_r (stacked)
                pl.BlockSpec((M, B * R_CH), lambda i: (0, 0)),         # w1 block-diag
                pl.BlockSpec((M, 1), lambda i: (0, 0)),                # b1
                pl.BlockSpec((M, K), lambda i: (0, 0)),                # dw tap weights
                pl.BlockSpec((M, 1), lambda i: (0, 0)),                # dw bias
                pl.BlockSpec((M, M), lambda i: (0, 0)),                # w3 block-diag
                pl.BlockSpec((M, 1), lambda i: (0, 0)),                # b3
                pl.BlockSpec((K, HW), lambda i: (0, 0)),               # tap boundary masks
            ],
            out_specs=pl.BlockSpec((B, OUT_CH, HW), lambda i: (0, 0, 0)),
        ),
        compiler_params=pltpu.CompilerParams(dimension_semantics=("arbitrary",)),
    )(x_l, x_r, w1_bd, b1_bd, wdw_bd, bdw_bd, w3_bd, b3_bd, _MASKS)

    return out.reshape(B, OUT_CH, H, W)


# ------------------------- pure-JAX reference (check) ------------------------
def _bn_ref(x, bn):
    gamma, beta, mean, var = bn
    return ((x - mean[None, :, None, None])
            / jnp.sqrt(var + EPS)[None, :, None, None]
            * gamma[None, :, None, None] + beta[None, :, None, None])


def basic_unit_ref(x, w1, bn1, wdw, bn2, w3, bn3):
    x = x.astype(jnp.float32)
    x_l = x[:, :L_CH]
    x_r = x[:, L_CH:]
    dn = ('NCHW', 'OIHW', 'NCHW')
    y = lax.conv_general_dilated(x_r, w1, (1, 1), ((0, 0), (0, 0)),
                                 dimension_numbers=dn,
                                 precision=lax.Precision.HIGHEST)
    y = jax.nn.relu(_bn_ref(y, bn1))
    y = lax.conv_general_dilated(y, wdw, (1, 1), ((PAD, PAD), (PAD, PAD)),
                                 dimension_numbers=dn, feature_group_count=RO,
                                 precision=lax.Precision.HIGHEST)
    y = _bn_ref(y, bn2)
    y = lax.conv_general_dilated(y, w3, (1, 1), ((0, 0), (0, 0)),
                                 dimension_numbers=dn,
                                 precision=lax.Precision.HIGHEST)
    y = jax.nn.relu(_bn_ref(y, bn3))
    out = jnp.concatenate([x_l, y], axis=1)
    if OUT_CH % GROUPS == 0:
        out = out.reshape(B, GROUPS, OUT_CH // GROUPS, H, W)
        out = jnp.transpose(out, (0, 2, 1, 3, 4)).reshape(B, OUT_CH, H, W)
    return out


# ----------------------------------- main ------------------------------------
if __name__ == "__main__":
    key = jax.random.PRNGKey(0)
    ks = jax.random.split(key, 7)
    x = jax.random.normal(ks[0], (B, IN_CH, H, W), jnp.float32)

    w1 = 0.2 * jax.random.normal(ks[1], (RO, R_CH, 1, 1), jnp.float32)
    wdw = 0.2 * jax.random.normal(ks[2], (RO, 1, KH, KW), jnp.float32)
    w3 = 0.2 * jax.random.normal(ks[3], (RO, RO, 1, 1), jnp.float32)

    def bn_params(k):
        kg, kb, km, kv = jax.random.split(k, 4)
        gamma = 1.0 + 0.1 * jax.random.normal(kg, (RO,), jnp.float32)
        beta = 0.1 * jax.random.normal(kb, (RO,), jnp.float32)
        mean = 0.1 * jax.random.normal(km, (RO,), jnp.float32)
        var = 0.5 + jax.random.uniform(kv, (RO,), jnp.float32)
        return gamma, beta, mean, var

    bn1 = bn_params(ks[4])
    bn2 = bn_params(ks[5])
    bn3 = bn_params(ks[6])

    out = jax.block_until_ready(basic_unit(x, w1, bn1, wdw, bn2, w3, bn3))
    ref = jax.block_until_ready(basic_unit_ref(x, w1, bn1, wdw, bn2, w3, bn3))

    assert out.shape == (B, OUT_CH, H, W), out.shape
    max_err = float(jnp.max(jnp.abs(out - ref)))
    if max_err > 1e-3:
        raise AssertionError(f"mismatch vs reference: max abs err {max_err}")
    print("KERNEL_OK")
</pallas_src>

<mosaic_0001>
module attributes {stable_mosaic.version = 11 : i64} {
  func.func @_basic_unit_kernel(%arg0: i32, %arg1: memref<2x2x256xf32, #tpu.memory_space<vmem>>, %arg2: memref<4x256xf32, #tpu.memory_space<vmem>>, %arg3: memref<12x4xf32, #tpu.memory_space<vmem>>, %arg4: memref<12x1xf32, #tpu.memory_space<vmem>>, %arg5: memref<12x9xf32, #tpu.memory_space<vmem>>, %arg6: memref<12x1xf32, #tpu.memory_space<vmem>>, %arg7: memref<12x12xf32, #tpu.memory_space<vmem>>, %arg8: memref<12x1xf32, #tpu.memory_space<vmem>>, %arg9: memref<9x256xf32, #tpu.memory_space<vmem>>, %arg10: memref<2x8x256xf32, #tpu.memory_space<vmem>>) attributes {dimension_semantics = [#tpu.dimension_semantics<arbitrary>], iteration_bounds = array<i64: 1>, scalar_prefetch = 0 : i64, scratch_operands = 0 : i64, tpu.core_type = #tpu.core_type<tc>, window_params = [{pipeline_mode = #tpu.pipeline_mode<synchronous>, transform_indices = @transform_0, window_bounds = array<i64: 2, 2, 256>}, {pipeline_mode = #tpu.pipeline_mode<synchronous>, transform_indices = @transform_1, window_bounds = array<i64: 4, 256>}, {pipeline_mode = #tpu.pipeline_mode<synchronous>, transform_indices = @transform_2, window_bounds = array<i64: 12, 4>}, {pipeline_mode = #tpu.pipeline_mode<synchronous>, transform_indices = @transform_3, window_bounds = array<i64: 12, 1>}, {pipeline_mode = #tpu.pipeline_mode<synchronous>, transform_indices = @transform_4, window_bounds = array<i64: 12, 9>}, {pipeline_mode = #tpu.pipeline_mode<synchronous>, transform_indices = @transform_5, window_bounds = array<i64: 12, 1>}, {pipeline_mode = #tpu.pipeline_mode<synchronous>, transform_indices = @transform_6, window_bounds = array<i64: 12, 12>}, {pipeline_mode = #tpu.pipeline_mode<synchronous>, transform_indices = @transform_7, window_bounds = array<i64: 12, 1>}, {pipeline_mode = #tpu.pipeline_mode<synchronous>, transform_indices = @transform_8, window_bounds = array<i64: 9, 256>}, {pipeline_mode = #tpu.pipeline_mode<synchronous>, transform_indices = @transform_9, window_bounds = array<i64: 2, 8, 256>}]} {
    %c0 = arith.constant 0 : index
    %c0_0 = arith.constant 0 : index
    %0 = vector.load %arg2[%c0, %c0_0] : memref<4x256xf32, #tpu.memory_space<vmem>>, vector<4x256xf32>
    %c0_1 = arith.constant 0 : index
    %c0_2 = arith.constant 0 : index
    %1 = vector.load %arg3[%c0_1, %c0_2] : memref<12x4xf32, #tpu.memory_space<vmem>>, vector<12x4xf32>
    %cst = arith.constant dense<0.000000e+00> : vector<12x256xf32>
    %2 = tpu.matmul %1, %0, %cst {dimension_numbers = #tpu.dot_dimension_numbers<[1], [0], [0], [1], [0, 0, 1, 1], [], []>} : vector<12x4xf32>, vector<4x256xf32>, vector<12x256xf32> -> vector<12x256xf32>
    %c0_3 = arith.constant 0 : index
    %c0_4 = arith.constant 0 : index
    %3 = vector.load %arg4[%c0_3, %c0_4] : memref<12x1xf32, #tpu.memory_space<vmem>>, vector<12x1xf32>
    %4 = vector.broadcast %3 : vector<12x1xf32> to vector<12x256xf32>
    %5 = arith.addf %2, %4 : vector<12x256xf32>
    %cst_5 = arith.constant 0.000000e+00 : f32
    %6 = vector.broadcast %cst_5 : f32 to vector<12x256xf32>
    %7 = arith.maximumf %5, %6 : vector<12x256xf32>
    %c0_6 = arith.constant 0 : index
    %c0_7 = arith.constant 0 : index
    %8 = vector.load %arg5[%c0_6, %c0_7] : memref<12x9xf32, #tpu.memory_space<vmem>>, vector<12x9xf32>
    %cst_8 = arith.constant 0.000000e+00 : f32
    %9 = vector.broadcast %cst_8 : f32 to vector<12x256xf32>
    %c17_i32 = arith.constant 17 : i32
    %10 = tpu.dynamic_rotate %7 by %c17_i32 dim 1 : vector<12x256xf32>, i32 -> vector<12x256xf32>
    %c0_9 = arith.constant 0 : index
    %c0_10 = arith.constant 0 : index
    %11 = vector.load %arg9[%c0_9, %c0_10] : memref<9x256xf32, #tpu.memory_space<vmem>>, vector<1x256xf32>
    %12 = vector.broadcast %11 : vector<1x256xf32> to vector<12x256xf32>
    %13 = arith.mulf %10, %12 : vector<12x256xf32>
    %14 = vector.extract_strided_slice %8 {offsets = [0, 0], sizes = [12, 1], strides = [1, 1]} : vector<12x9xf32> to vector<12x1xf32>
    %15 = vector.broadcast %14 : vector<12x1xf32> to vector<12x256xf32>
    %16 = arith.mulf %13, %15 : vector<12x256xf32>
    %17 = arith.addf %9, %16 : vector<12x256xf32>
    %c16_i32 = arith.constant 16 : i32
    %18 = tpu.dynamic_rotate %7 by %c16_i32 dim 1 : vector<12x256xf32>, i32 -> vector<12x256xf32>
    %c1 = arith.constant 1 : index
    %c0_11 = arith.constant 0 : index
    %19 = vector.load %arg9[%c1, %c0_11] : memref<9x256xf32, #tpu.memory_space<vmem>>, vector<1x256xf32>
    %20 = vector.broadcast %19 : vector<1x256xf32> to vector<12x256xf32>
    %21 = arith.mulf %18, %20 : vector<12x256xf32>
    %22 = vector.extract_strided_slice %8 {offsets = [0, 1], sizes = [12, 1], strides = [1, 1]} : vector<12x9xf32> to vector<12x1xf32>
    %23 = vector.broadcast %22 : vector<12x1xf32> to vector<12x256xf32>
    %24 = arith.mulf %21, %23 : vector<12x256xf32>
    %25 = arith.addf %17, %24 : vector<12x256xf32>
    %c15_i32 = arith.constant 15 : i32
    %26 = tpu.dynamic_rotate %7 by %c15_i32 dim 1 : vector<12x256xf32>, i32 -> vector<12x256xf32>
    %c2 = arith.constant 2 : index
    %c0_12 = arith.constant 0 : index
    %27 = vector.load %arg9[%c2, %c0_12] : memref<9x256xf32, #tpu.memory_space<vmem>>, vector<1x256xf32>
    %28 = vector.broadcast %27 : vector<1x256xf32> to vector<12x256xf32>
    %29 = arith.mulf %26, %28 : vector<12x256xf32>
    %30 = vector.extract_strided_slice %8 {offsets = [0, 2], sizes = [12, 1], strides = [1, 1]} : vector<12x9xf32> to vector<12x1xf32>
    %31 = vector.broadcast %30 : vector<12x1xf32> to vector<12x256xf32>
    %32 = arith.mulf %29, %31 : vector<12x256xf32>
    %33 = arith.addf %25, %32 : vector<12x256xf32>
    %c1_i32 = arith.constant 1 : i32
    %34 = tpu.dynamic_rotate %7 by %c1_i32 dim 1 : vector<12x256xf32>, i32 -> vector<12x256xf32>
    %c3 = arith.constant 3 : index
    %c0_13 = arith.constant 0 : index
    %35 = vector.load %arg9[%c3, %c0_13] : memref<9x256xf32, #tpu.memory_space<vmem>>, vector<1x256xf32>
    %36 = vector.broadcast %35 : vector<1x256xf32> to vector<12x256xf32>
    %37 = arith.mulf %34, %36 : vector<12x256xf32>
    %38 = vector.extract_strided_slice %8 {offsets = [0, 3], sizes = [12, 1], strides = [1, 1]} : vector<12x9xf32> to vector<12x1xf32>
    %39 = vector.broadcast %38 : vector<12x1xf32> to vector<12x256xf32>
    %40 = arith.mulf %37, %39 : vector<12x256xf32>
    %41 = arith.addf %33, %40 : vector<12x256xf32>
    %c4 = arith.constant 4 : index
    %c0_14 = arith.constant 0 : index
    %42 = vector.load %arg9[%c4, %c0_14] : memref<9x256xf32, #tpu.memory_space<vmem>>, vector<1x256xf32>
    %43 = vector.broadcast %42 : vector<1x256xf32> to vector<12x256xf32>
    %44 = arith.mulf %7, %43 : vector<12x256xf32>
    %45 = vector.extract_strided_slice %8 {offsets = [0, 4], sizes = [12, 1], strides = [1, 1]} : vector<12x9xf32> to vector<12x1xf32>
    %46 = vector.broadcast %45 : vector<12x1xf32> to vector<12x256xf32>
    %47 = arith.mulf %44, %46 : vector<12x256xf32>
    %48 = arith.addf %41, %47 : vector<12x256xf32>
    %c255_i32 = arith.constant 255 : i32
    %49 = tpu.dynamic_rotate %7 by %c255_i32 dim 1 : vector<12x256xf32>, i32 -> vector<12x256xf32>
    %c5 = arith.constant 5 : index
    %c0_15 = arith.constant 0 : index
    %50 = vector.load %arg9[%c5, %c0_15] : memref<9x256xf32, #tpu.memory_space<vmem>>, vector<1x256xf32>
    %51 = vector.broadcast %50 : vector<1x256xf32> to vector<12x256xf32>
    %52 = arith.mulf %49, %51 : vector<12x256xf32>
    %53 = vector.extract_strided_slice %8 {offsets = [0, 5], sizes = [12, 1], strides = [1, 1]} : vector<12x9xf32> to vector<12x1xf32>
    %54 = vector.broadcast %53 : vector<12x1xf32> to vector<12x256xf32>
    %55 = arith.mulf %52, %54 : vector<12x256xf32>
    %56 = arith.addf %48, %55 : vector<12x256xf32>
    %c241_i32 = arith.constant 241 : i32
    %57 = tpu.dynamic_rotate %7 by %c241_i32 dim 1 : vector<12x256xf32>, i32 -> vector<12x256xf32>
    %c6 = arith.constant 6 : index
    %c0_16 = arith.constant 0 : index
    %58 = vector.load %arg9[%c6, %c0_16] : memref<9x256xf32, #tpu.memory_space<vmem>>, vector<1x256xf32>
    %59 = vector.broadcast %58 : vector<1x256xf32> to vector<12x256xf32>
    %60 = arith.mulf %57, %59 : vector<12x256xf32>
    %61 = vector.extract_strided_slice %8 {offsets = [0, 6], sizes = [12, 1], strides = [1, 1]} : vector<12x9xf32> to vector<12x1xf32>
    %62 = vector.broadcast %61 : vector<12x1xf32> to vector<12x256xf32>
    %63 = arith.mulf %60, %62 : vector<12x256xf32>
    %64 = arith.addf %56, %63 : vector<12x256xf32>
    %c240_i32 = arith.constant 240 : i32
    %65 = tpu.dynamic_rotate %7 by %c240_i32 dim 1 : vector<12x256xf32>, i32 -> vector<12x256xf32>
    %c7 = arith.constant 7 : index
    %c0_17 = arith.constant 0 : index
    %66 = vector.load %arg9[%c7, %c0_17] : memref<9x256xf32, #tpu.memory_space<vmem>>, vector<1x256xf32>
    %67 = vector.broadcast %66 : vector<1x256xf32> to vector<12x256xf32>
    %68 = arith.mulf %65, %67 : vector<12x256xf32>
    %69 = vector.extract_strided_slice %8 {offsets = [0, 7], sizes = [12, 1], strides = [1, 1]} : vector<12x9xf32> to vector<12x1xf32>
    %70 = vector.broadcast %69 : vector<12x1xf32> to vector<12x256xf32>
    %71 = arith.mulf %68, %70 : vector<12x256xf32>
    %72 = arith.addf %64, %71 : vector<12x256xf32>
    %c239_i32 = arith.constant 239 : i32
    %73 = tpu.dynamic_rotate %7 by %c239_i32 dim 1 : vector<12x256xf32>, i32 -> vector<12x256xf32>
    %c8 = arith.constant 8 : index
    %c0_18 = arith.constant 0 : index
    %74 = vector.load %arg9[%c8, %c0_18] : memref<9x256xf32, #tpu.memory_space<vmem>>, vector<1x256xf32>
    %75 = vector.broadcast %74 : vector<1x256xf32> to vector<12x256xf32>
    %76 = arith.mulf %73, %75 : vector<12x256xf32>
    %77 = vector.extract_strided_slice %8 {offsets = [0, 8], sizes = [12, 1], strides = [1, 1]} : vector<12x9xf32> to vector<12x1xf32>
    %78 = vector.broadcast %77 : vector<12x1xf32> to vector<12x256xf32>
    %79 = arith.mulf %76, %78 : vector<12x256xf32>
    %80 = arith.addf %72, %79 : vector<12x256xf32>
    %c0_19 = arith.constant 0 : index
    %c0_20 = arith.constant 0 : index
    %81 = vector.load %arg6[%c0_19, %c0_20] : memref<12x1xf32, #tpu.memory_space<vmem>>, vector<12x1xf32>
    %82 = vector.broadcast %81 : vector<12x1xf32> to vector<12x256xf32>
    %83 = arith.addf %80, %82 : vector<12x256xf32>
    %c0_21 = arith.constant 0 : index
    %c0_22 = arith.constant 0 : index
    %84 = vector.load %arg7[%c0_21, %c0_22] : memref<12x12xf32, #tpu.memory_space<vmem>>, vector<12x12xf32>
    %cst_23 = arith.constant dense<0.000000e+00> : vector<12x256xf32>
    %85 = tpu.matmul %84, %83, %cst_23 {dimension_numbers = #tpu.dot_dimension_numbers<[1], [0], [0], [1], [0, 0, 1, 1], [], []>} : vector<12x12xf32>, vector<12x256xf32>, vector<12x256xf32> -> vector<12x256xf32>
    %c0_24 = arith.constant 0 : index
    %c0_25 = arith.constant 0 : index
    %86 = vector.load %arg8[%c0_24, %c0_25] : memref<12x1xf32, #tpu.memory_space<vmem>>, vector<12x1xf32>
    %87 = vector.broadcast %86 : vector<12x1xf32> to vector<12x256xf32>
    %88 = arith.addf %85, %87 : vector<12x256xf32>
    %cst_26 = arith.constant 0.000000e+00 : f32
    %89 = vector.broadcast %cst_26 : f32 to vector<12x256xf32>
    %90 = arith.maximumf %88, %89 : vector<12x256xf32>
    %c0_27 = arith.constant 0 : index
    %c0_28 = arith.constant 0 : index
    %c0_29 = arith.constant 0 : index
    %91 = vector.load %arg1[%c0_27, %c0_28, %c0_29] : memref<2x2x256xf32, #tpu.memory_space<vmem>>, vector<1x1x256xf32>
    %92 = vector.shape_cast %91 : vector<1x1x256xf32> to vector<1x256xf32>
    %c0_30 = arith.constant 0 : index
    %c0_31 = arith.constant 0 : index
    %c0_32 = arith.constant 0 : index
    %93 = vector.load %arg10[%c0_30, %c0_31, %c0_32] : memref<2x8x256xf32, #tpu.memory_space<vmem>>, vector<1x1x256xf32>
    %94 = vector.shape_cast %93 : vector<1x1x256xf32> to vector<1x256xf32>
    %95 = vector.shape_cast %92 : vector<1x256xf32> to vector<1x1x256xf32>
    tpu.vector_store %arg10[%c0_30, %c0_31, %c0_32], %95 {strides = array<i32>} : memref<2x8x256xf32, #tpu.memory_space<vmem>>, vector<1x1x256xf32>,
    %c0_33 = arith.constant 0 : index
    %c1_34 = arith.constant 1 : index
    %c0_35 = arith.constant 0 : index
    %96 = vector.load %arg1[%c0_33, %c1_34, %c0_35] : memref<2x2x256xf32, #tpu.memory_space<vmem>>, vector<1x1x256xf32>
    %97 = vector.shape_cast %96 : vector<1x1x256xf32> to vector<1x256xf32>
    %c0_36 = arith.constant 0 : index
    %c2_37 = arith.constant 2 : index
    %c0_38 = arith.constant 0 : index
    %98 = vector.load %arg10[%c0_36, %c2_37, %c0_38] : memref<2x8x256xf32, #tpu.memory_space<vmem>>, vector<1x1x256xf32>
    %99 = vector.shape_cast %98 : vector<1x1x256xf32> to vector<1x256xf32>
    %100 = vector.shape_cast %97 : vector<1x256xf32> to vector<1x1x256xf32>
    tpu.vector_store %arg10[%c0_36, %c2_37, %c0_38], %100 {strides = array<i32>} : memref<2x8x256xf32, #tpu.memory_space<vmem>>, vector<1x1x256xf32>,
    %101 = vector.extract_strided_slice %90 {offsets = [0, 0], sizes = [1, 256], strides = [1, 1]} : vector<12x256xf32> to vector<1x256xf32>
    %c0_39 = arith.constant 0 : index
    %c4_40 = arith.constant 4 : index
    %c0_41 = arith.constant 0 : index
    %102 = vector.load %arg10[%c0_39, %c4_40, %c0_41] : memref<2x8x256xf32, #tpu.memory_space<vmem>>, vector<1x1x256xf32>
    %103 = vector.shape_cast %102 : vector<1x1x256xf32> to vector<1x256xf32>
    %104 = vector.shape_cast %101 : vector<1x256xf32> to vector<1x1x256xf32>
    tpu.vector_store %arg10[%c0_39, %c4_40, %c0_41], %104 {strides = array<i32>} : memref<2x8x256xf32, #tpu.memory_space<vmem>>, vector<1x1x256xf32>,
    %105 = vector.extract_strided_slice %90 {offsets = [1, 0], sizes = [1, 256], strides = [1, 1]} : vector<12x256xf32> to vector<1x256xf32>
    %c0_42 = arith.constant 0 : index
    %c6_43 = arith.constant 6 : index
    %c0_44 = arith.constant 0 : index
    %106 = vector.load %arg10[%c0_42, %c6_43, %c0_44] : memref<2x8x256xf32, #tpu.memory_space<vmem>>, vector<1x1x256xf32>
    %107 = vector.shape_cast %106 : vector<1x1x256xf32> to vector<1x256xf32>
    %108 = vector.shape_cast %105 : vector<1x256xf32> to vector<1x1x256xf32>
    tpu.vector_store %arg10[%c0_42, %c6_43, %c0_44], %108 {strides = array<i32>} : memref<2x8x256xf32, #tpu.memory_space<vmem>>, vector<1x1x256xf32>,
    %109 = vector.extract_strided_slice %90 {offsets = [2, 0], sizes = [1, 256], strides = [1, 1]} : vector<12x256xf32> to vector<1x256xf32>
    %c0_45 = arith.constant 0 : index
    %c1_46 = arith.constant 1 : index
    %c0_47 = arith.constant 0 : index
    %110 = vector.load %arg10[%c0_45, %c1_46, %c0_47] : memref<2x8x256xf32, #tpu.memory_space<vmem>>, vector<1x1x256xf32>
    %111 = vector.shape_cast %110 : vector<1x1x256xf32> to vector<1x256xf32>
    %112 = vector.shape_cast %109 : vector<1x256xf32> to vector<1x1x256xf32>
    tpu.vector_store %arg10[%c0_45, %c1_46, %c0_47], %112 {strides = array<i32>} : memref<2x8x256xf32, #tpu.memory_space<vmem>>, vector<1x1x256xf32>,
    %113 = vector.extract_strided_slice %90 {offsets = [3, 0], sizes = [1, 256], strides = [1, 1]} : vector<12x256xf32> to vector<1x256xf32>
    %c0_48 = arith.constant 0 : index
    %c3_49 = arith.constant 3 : index
    %c0_50 = arith.constant 0 : index
    %114 = vector.load %arg10[%c0_48, %c3_49, %c0_50] : memref<2x8x256xf32, #tpu.memory_space<vmem>>, vector<1x1x256xf32>
    %115 = vector.shape_cast %114 : vector<1x1x256xf32> to vector<1x256xf32>
    %116 = vector.shape_cast %113 : vector<1x256xf32> to vector<1x1x256xf32>
    tpu.vector_store %arg10[%c0_48, %c3_49, %c0_50], %116 {strides = array<i32>} : memref<2x8x256xf32, #tpu.memory_space<vmem>>, vector<1x1x256xf32>,
    %117 = vector.extract_strided_slice %90 {offsets = [4, 0], sizes = [1, 256], strides = [1, 1]} : vector<12x256xf32> to vector<1x256xf32>
    %c0_51 = arith.constant 0 : index
    %c5_52 = arith.constant 5 : index
    %c0_53 = arith.constant 0 : index
    %118 = vector.load %arg10[%c0_51, %c5_52, %c0_53] : memref<2x8x256xf32, #tpu.memory_space<vmem>>, vector<1x1x256xf32>
    %119 = vector.shape_cast %118 : vector<1x1x256xf32> to vector<1x256xf32>
    %120 = vector.shape_cast %117 : vector<1x256xf32> to vector<1x1x256xf32>
    tpu.vector_store %arg10[%c0_51, %c5_52, %c0_53], %120 {strides = array<i32>} : memref<2x8x256xf32, #tpu.memory_space<vmem>>, vector<1x1x256xf32>,
    %121 = vector.extract_strided_slice %90 {offsets = [5, 0], sizes = [1, 256], strides = [1, 1]} : vector<12x256xf32> to vector<1x256xf32>
    %c0_54 = arith.constant 0 : index
    %c7_55 = arith.constant 7 : index
    %c0_56 = arith.constant 0 : index
    %122 = vector.load %arg10[%c0_54, %c7_55, %c0_56] : memref<2x8x256xf32, #tpu.memory_space<vmem>>, vector<1x1x256xf32>
    %123 = vector.shape_cast %122 : vector<1x1x256xf32> to vector<1x256xf32>
    %124 = vector.shape_cast %121 : vector<1x256xf32> to vector<1x1x256xf32>
    tpu.vector_store %arg10[%c0_54, %c7_55, %c0_56], %124 {strides = array<i32>} : memref<2x8x256xf32, #tpu.memory_space<vmem>>, vector<1x1x256xf32>,
    %c1_57 = arith.constant 1 : index
    %c0_58 = arith.constant 0 : index
    %c0_59 = arith.constant 0 : index
    %125 = vector.load %arg1[%c1_57, %c0_58, %c0_59] : memref<2x2x256xf32, #tpu.memory_space<vmem>>, vector<1x1x256xf32>
    %126 = vector.shape_cast %125 : vector<1x1x256xf32> to vector<1x256xf32>
    %c1_60 = arith.constant 1 : index
    %c0_61 = arith.constant 0 : index
    %c0_62 = arith.constant 0 : index
    %127 = vector.load %arg10[%c1_60, %c0_61, %c0_62] : memref<2x8x256xf32, #tpu.memory_space<vmem>>, vector<1x1x256xf32>
    %128 = vector.shape_cast %127 : vector<1x1x256xf32> to vector<1x256xf32>
    %129 = vector.shape_cast %126 : vector<1x256xf32> to vector<1x1x256xf32>
    tpu.vector_store %arg10[%c1_60, %c0_61, %c0_62], %129 {strides = array<i32>} : memref<2x8x256xf32, #tpu.memory_space<vmem>>, vector<1x1x256xf32>,
    %c1_63 = arith.constant 1 : index
    %c1_64 = arith.constant 1 : index
    %c0_65 = arith.constant 0 : index
    %130 = vector.load %arg1[%c1_63, %c1_64, %c0_65] : memref<2x2x256xf32, #tpu.memory_space<vmem>>, vector<1x1x256xf32>
    %131 = vector.shape_cast %130 : vector<1x1x256xf32> to vector<1x256xf32>
    %c1_66 = arith.constant 1 : index
    %c2_67 = arith.constant 2 : index
    %c0_68 = arith.constant 0 : index
    %132 = vector.load %arg10[%c1_66, %c2_67, %c0_68] : memref<2x8x256xf32, #tpu.memory_space<vmem>>, vector<1x1x256xf32>
    %133 = vector.shape_cast %132 : vector<1x1x256xf32> to vector<1x256xf32>
    %134 = vector.shape_cast %131 : vector<1x256xf32> to vector<1x1x256xf32>
    tpu.vector_store %arg10[%c1_66, %c2_67, %c0_68], %134 {strides = array<i32>} : memref<2x8x256xf32, #tpu.memory_space<vmem>>, vector<1x1x256xf32>,
    %135 = vector.extract_strided_slice %90 {offsets = [6, 0], sizes = [1, 256], strides = [1, 1]} : vector<12x256xf32> to vector<1x256xf32>
    %c1_69 = arith.constant 1 : index
    %c4_70 = arith.constant 4 : index
    %c0_71 = arith.constant 0 : index
    %136 = vector.load %arg10[%c1_69, %c4_70, %c0_71] : memref<2x8x256xf32, #tpu.memory_space<vmem>>, vector<1x1x256xf32>
    %137 = vector.shape_cast %136 : vector<1x1x256xf32> to vector<1x256xf32>
    %138 = vector.shape_cast %135 : vector<1x256xf32> to vector<1x1x256xf32>
    tpu.vector_store %arg10[%c1_69, %c4_70, %c0_71], %138 {strides = array<i32>} : memref<2x8x256xf32, #tpu.memory_space<vmem>>, vector<1x1x256xf32>,
    %139 = vector.extract_strided_slice %90 {offsets = [7, 0], sizes = [1, 256], strides = [1, 1]} : vector<12x256xf32> to vector<1x256xf32>
    %c1_72 = arith.constant 1 : index
    %c6_73 = arith.constant 6 : index
    %c0_74 = arith.constant 0 : index
    %140 = vector.load %arg10[%c1_72, %c6_73, %c0_74] : memref<2x8x256xf32, #tpu.memory_space<vmem>>, vector<1x1x256xf32>
    %141 = vector.shape_cast %140 : vector<1x1x256xf32> to vector<1x256xf32>
    %142 = vector.shape_cast %139 : vector<1x256xf32> to vector<1x1x256xf32>
    tpu.vector_store %arg10[%c1_72, %c6_73, %c0_74], %142 {strides = array<i32>} : memref<2x8x256xf32, #tpu.memory_space<vmem>>, vector<1x1x256xf32>,
    %143 = vector.extract_strided_slice %90 {offsets = [8, 0], sizes = [1, 256], strides = [1, 1]} : vector<12x256xf32> to vector<1x256xf32>
    %c1_75 = arith.constant 1 : index
    %c1_76 = arith.constant 1 : index
    %c0_77 = arith.constant 0 : index
    %144 = vector.load %arg10[%c1_75, %c1_76, %c0_77] : memref<2x8x256xf32, #tpu.memory_space<vmem>>, vector<1x1x256xf32>
    %145 = vector.shape_cast %144 : vector<1x1x256xf32> to vector<1x256xf32>
    %146 = vector.shape_cast %143 : vector<1x256xf32> to vector<1x1x256xf32>
    tpu.vector_store %arg10[%c1_75, %c1_76, %c0_77], %146 {strides = array<i32>} : memref<2x8x256xf32, #tpu.memory_space<vmem>>, vector<1x1x256xf32>,
    %147 = vector.extract_strided_slice %90 {offsets = [9, 0], sizes = [1, 256], strides = [1, 1]} : vector<12x256xf32> to vector<1x256xf32>
    %c1_78 = arith.constant 1 : index
    %c3_79 = arith.constant 3 : index
    %c0_80 = arith.constant 0 : index
    %148 = vector.load %arg10[%c1_78, %c3_79, %c0_80] : memref<2x8x256xf32, #tpu.memory_space<vmem>>, vector<1x1x256xf32>
    %149 = vector.shape_cast %148 : vector<1x1x256xf32> to vector<1x256xf32>
    %150 = vector.shape_cast %147 : vector<1x256xf32> to vector<1x1x256xf32>
    tpu.vector_store %arg10[%c1_78, %c3_79, %c0_80], %150 {strides = array<i32>} : memref<2x8x256xf32, #tpu.memory_space<vmem>>, vector<1x1x256xf32>,
    %151 = vector.extract_strided_slice %90 {offsets = [10, 0], sizes = [1, 256], strides = [1, 1]} : vector<12x256xf32> to vector<1x256xf32>
    %c1_81 = arith.constant 1 : index
    %c5_82 = arith.constant 5 : index
    %c0_83 = arith.constant 0 : index
    %152 = vector.load %arg10[%c1_81, %c5_82, %c0_83] : memref<2x8x256xf32, #tpu.memory_space<vmem>>, vector<1x1x256xf32>
    %153 = vector.shape_cast %152 : vector<1x1x256xf32> to vector<1x256xf32>
    %154 = vector.shape_cast %151 : vector<1x256xf32> to vector<1x1x256xf32>
    tpu.vector_store %arg10[%c1_81, %c5_82, %c0_83], %154 {strides = array<i32>} : memref<2x8x256xf32, #tpu.memory_space<vmem>>, vector<1x1x256xf32>,
    %155 = vector.extract_strided_slice %90 {offsets = [11, 0], sizes = [1, 256], strides = [1, 1]} : vector<12x256xf32> to vector<1x256xf32>
    %c1_84 = arith.constant 1 : index
    %c7_85 = arith.constant 7 : index
    %c0_86 = arith.constant 0 : index
    %156 = vector.load %arg10[%c1_84, %c7_85, %c0_86] : memref<2x8x256xf32, #tpu.memory_space<vmem>>, vector<1x1x256xf32>
    %157 = vector.shape_cast %156 : vector<1x1x256xf32> to vector<1x256xf32>
    %158 = vector.shape_cast %155 : vector<1x256xf32> to vector<1x1x256xf32>
    tpu.vector_store %arg10[%c1_84, %c7_85, %c0_86], %158 {strides = array<i32>} : memref<2x8x256xf32, #tpu.memory_space<vmem>>, vector<1x1x256xf32>,
    return
  }
  func.func @transform_0(%arg0: i32) -> (i32, i32, i32) {
    %c0_i32 = arith.constant 0 : i32
    %c0_i32_0 = arith.constant 0 : i32
    %c0_i32_1 = arith.constant 0 : i32
    %c0_i32_2 = arith.constant 0 : i32
    return %c0_i32, %c0_i32_0, %c0_i32_1 : i32, i32, i32
  }
  func.func @transform_1(%arg0: i32) -> (i32, i32) {
    %c0_i32 = arith.constant 0 : i32
    %c0_i32_0 = arith.constant 0 : i32
    %c0_i32_1 = arith.constant 0 : i32
    return %c0_i32, %c0_i32_0 : i32, i32
  }
  func.func @transform_2(%arg0: i32) -> (i32, i32) {
    %c0_i32 = arith.constant 0 : i32
    %c0_i32_0 = arith.constant 0 : i32
    %c0_i32_1 = arith.constant 0 : i32
    return %c0_i32, %c0_i32_0 : i32, i32
  }
  func.func @transform_3(%arg0: i32) -> (i32, i32) {
    %c0_i32 = arith.constant 0 : i32
    %c0_i32_0 = arith.constant 0 : i32
    %c0_i32_1 = arith.constant 0 : i32
    return %c0_i32, %c0_i32_0 : i32, i32
  }
  func.func @transform_4(%arg0: i32) -> (i32, i32) {
    %c0_i32 = arith.constant 0 : i32
    %c0_i32_0 = arith.constant 0 : i32
    %c0_i32_1 = arith.constant 0 : i32
    return %c0_i32, %c0_i32_0 : i32, i32
  }
  func.func @transform_5(%arg0: i32) -> (i32, i32) {
    %c0_i32 = arith.constant 0 : i32
    %c0_i32_0 = arith.constant 0 : i32
    %c0_i32_1 = arith.constant 0 : i32
    return %c0_i32, %c0_i32_0 : i32, i32
  }
  func.func @transform_6(%arg0: i32) -> (i32, i32) {
    %c0_i32 = arith.constant 0 : i32
    %c0_i32_0 = arith.constant 0 : i32
    %c0_i32_1 = arith.constant 0 : i32
    return %c0_i32, %c0_i32_0 : i32, i32
  }
  func.func @transform_7(%arg0: i32) -> (i32, i32) {
    %c0_i32 = arith.constant 0 : i32
    %c0_i32_0 = arith.constant 0 : i32
    %c0_i32_1 = arith.constant 0 : i32
    return %c0_i32, %c0_i32_0 : i32, i32
  }
  func.func @transform_8(%arg0: i32) -> (i32, i32) {
    %c0_i32 = arith.constant 0 : i32
    %c0_i32_0 = arith.constant 0 : i32
    %c0_i32_1 = arith.constant 0 : i32
    return %c0_i32, %c0_i32_0 : i32, i32
  }
  func.func @transform_9(%arg0: i32) -> (i32, i32, i32) {
    %c0_i32 = arith.constant 0 : i32
    %c0_i32_0 = arith.constant 0 : i32
    %c0_i32_1 = arith.constant 0 : i32
    %c0_i32_2 = arith.constant 0 : i32
    return %c0_i32, %c0_i32_0, %c0_i32_1 : i32, i32, i32
  }
}

</mosaic_0001>

<llo_original>
// kernel: tpu_custom_call.1
$region0: #{tpu_custom_call.1}
  #allocation0 [shape = 'u32[]', space=smem, size = 0x4, offset = 0x4, fixed_abs, tag = 'smem constant byte address 0x4 - core index']
  #allocation1 [shape = 'u32[144,128]{1,0:T(1,128)}', space=vmem, size = 0x12000, scoped, tag = 'internal scratch']
  %s0 = inlined_call_operand.hbm [shape: f32[2,2,256], index: 0, kind: input, shape index: {}]
  %s1 = inlined_call_operand.vmem [shape: f32[4,256], index: 1, kind: input, shape index: {}]
  %s2 = inlined_call_operand.vmem [shape: f32[12,4], index: 2, kind: input, shape index: {}]
  %s3 = inlined_call_operand.vmem [shape: f32[12,1], index: 3, kind: input, shape index: {}]
  %s4 = inlined_call_operand.vmem [shape: f32[12,9], index: 4, kind: input, shape index: {}]
  %s5 = inlined_call_operand.vmem [shape: f32[12,1], index: 5, kind: input, shape index: {}]
  %s6 = inlined_call_operand.vmem [shape: f32[12,12], index: 6, kind: input, shape index: {}]
  %s7 = inlined_call_operand.vmem [shape: f32[12,1], index: 7, kind: input, shape index: {}]
  %s8 = inlined_call_operand.vmem [shape: f32[9,256], index: 8, kind: input, shape index: {}]
  %s9 = inlined_call_operand.hbm [shape: f32[2,8,256], index: 9, kind: output, shape index: {}]
  %s10 = sld [smem:[#allocation0]]
  $region50: #{tpu_custom_call.1} parent=0
    _
  %s12 = ssub.s32 1, %s10
  %s13 = scalar_select 0, %s12, %s10
  $region1: #{tpu_custom_call.1} parent=0
    #allocation2 [shape = 'u8[4096]{0}', space=vmem, size = 0x1000, scoped, tag = 'input window, operand 0, single buffered']
    #allocation3 [shape = 's32[1]{0}', space=sflag, size = 0x4, scoped, tag = 'scoped memory for tpu_custom_call.1']
    #allocation4 [shape = 's32[1]{0}', space=sflag, size = 0x4, scoped, tag = 'scoped memory for tpu_custom_call.1']
    #allocation5 [shape = 'u8[16384]{0}', space=vmem, size = 0x4000, scoped, tag = 'output window, operand 0, single buffered']
    %14 = vsyncpa [#allocation3], 0
    %15 = vsyncpa [#allocation4], 0
    // Predicated region
    $region2: #{tpu_custom_call.1} parent=1 // pred_check
      _
    $region3: #{tpu_custom_call.1} parent=1 // pred_check_branch
      %17 = sbr.rel (0) target = $region5
    $region4: #{tpu_custom_call.1} parent=1 // pred_region
      %s19 = ssub.s32 128, 128
      %20 = vsyncadd [#allocation3], %s19
      %s21 = sshll.u32 [#allocation2], 4
      %s22 = int_to_ptr.vmem [resolvable:$true] %s21
      %27 = dma.hbm_to_vmem [thread:$0]  %s0, 128, %s22, [#allocation3], 64, 64, 4
    $region5: #{tpu_custom_call.1} parent=1 // pred_fallthru
      _
    // Predicated region
    $region6: #{tpu_custom_call.1} parent=1 // pred_check
      _
    $region7: #{tpu_custom_call.1} parent=1 // pred_check_branch
      %29 = sbr.rel (0) target = $region9
    $region8: #{tpu_custom_call.1} parent=1 // pred_region
      _
    $region9: #{tpu_custom_call.1} parent=1 // pred_fallthru
      _
    // Predicated region
    $region10: #{tpu_custom_call.1} parent=1 // pred_check
      _
    $region11: #{tpu_custom_call.1} parent=1 // pred_check_branch
      %31 = sbr.rel (0) target = $region13
    $region12: #{tpu_custom_call.1} parent=1 // pred_region
      _
    $region13: #{tpu_custom_call.1} parent=1 // pred_fallthru
      _
    // Predicated region
    $region14: #{tpu_custom_call.1} parent=1 // pred_check
      _
    $region15: #{tpu_custom_call.1} parent=1 // pred_check_branch
      %33 = sbr.rel (0) target = $region17
    $region16: #{tpu_custom_call.1} parent=1 // pred_region
      _
    $region17: #{tpu_custom_call.1} parent=1 // pred_fallthru
      _
    // Predicated region
    $region18: #{tpu_custom_call.1} parent=1 // pred_check
      _
    $region19: #{tpu_custom_call.1} parent=1 // pred_check_branch
      %35 = sbr.rel (0) target = $region21
    $region20: #{tpu_custom_call.1} parent=1 // pred_region
      _
    $region21: #{tpu_custom_call.1} parent=1 // pred_fallthru
      _
    // Predicated region
    $region22: #{tpu_custom_call.1} parent=1 // pred_check
      _
    $region23: #{tpu_custom_call.1} parent=1 // pred_check_branch
      %37 = sbr.rel (0) target = $region25
    $region24: #{tpu_custom_call.1} parent=1 // pred_region
      _
    $region25: #{tpu_custom_call.1} parent=1 // pred_fallthru
      _
    // Predicated region
    $region26: #{tpu_custom_call.1} parent=1 // pred_check
      _
    $region27: #{tpu_custom_call.1} parent=1 // pred_check_branch
      %39 = sbr.rel (0) target = $region29
    $region28: #{tpu_custom_call.1} parent=1 // pred_region
      _
    $region29: #{tpu_custom_call.1} parent=1 // pred_fallthru
      _
    // Predicated region
    $region30: #{tpu_custom_call.1} parent=1 // pred_check
      _
    $region31: #{tpu_custom_call.1} parent=1 // pred_check_branch
      %41 = sbr.rel (0) target = $region33
    $region32: #{tpu_custom_call.1} parent=1 // pred_region
      _
    $region33: #{tpu_custom_call.1} parent=1 // pred_fallthru
      _
    // Predicated region
    $region34: #{tpu_custom_call.1} parent=1 // pred_check
      _
    $region35: #{tpu_custom_call.1} parent=1 // pred_check_branch
      %43 = sbr.rel (0) target = $region37
    $region36: #{tpu_custom_call.1} parent=1 // pred_region
      _
    $region37: #{tpu_custom_call.1} parent=1 // pred_fallthru
      _
    // Predicated region
    $region38: #{tpu_custom_call.1} parent=1 // pred_check
      _
    $region39: #{tpu_custom_call.1} parent=1 // pred_check_branch
      %45 = sbr.rel (0) target = $region41
    $region40: #{tpu_custom_call.1} parent=1 // pred_region
      %46 = dma.done [#allocation3], 128
    $region41: #{tpu_custom_call.1} parent=1 // pred_fallthru
      _
    %v47 = vld [vmem:[%s1] sm:$0xff]
    %v48 = vld [vmem:[%s2] sm:$0xff]
    %v49 = vld [vmem:[%s2 + $0x8] sm:$0xf]
    %v50 = vld [vmem:[%s3] sm:$0xff]
    %v51 = vld [vmem:[%s3 + $0x8] sm:$0xf]
    %53 = vset.pattern.permute.xlu0 0
    %54 = vperm.xlu0 %53, %v50
    %v55 = vpop.permute.xlu0 %54
    %58 = vset.pattern.permute.xlu0 0
    %59 = vperm.xlu0 %58, %v51
    %v60 = vpop.permute.xlu0 %59
    %v63 = vcombine.high %v47, %v47
    %vm64 = vcmask 31744
    %v66 = vsel %vm64, %v48, 0
    %v69 = vsel %vm64, %v49, 0
    %vm71 = vcmask 1043456
    %v72 = vsel %vm71, %v47, 0
    %v74 = vsel %vm71, %v63, 0
    %76 = vmatprep.subr.mxu0 %v74
    %77 = vmatpush1.msra.mxu0 %v72
    %78 = vmatprep.subr.mxu0 0.0
    %79 = vmatpush1.msra.mxu0 0.0
    %80 = vmatprep.subr.mxu0 0.0
    %81 = vmatpush1.msra.mxu0 0.0
    %82 = vmatprep.subr.mxu0 0.0
    %83 = vmatpush1.msra.mxu0 0.0
    %84 = vmatprep.subr.mxu0 0.0
    %85 = vmatpush1.msra.mxu0 0.0
    %86 = vmatprep.subr.mxu0 0.0
    %87 = vmatpush1.msra.mxu0 0.0
    %88 = vmatprep.subr.mxu0 0.0
    %89 = vmatpush1.msra.mxu0 0.0
    %90 = vmatprep.subr.mxu0 0.0
    %91 = vmatpush1.msra.mxu0 0.0
    %92 = vmatprep.subr.mxu0 0.0
    %93 = vmatpush1.msra.mxu0 0.0
    %94 = vmatprep.subr.mxu0 0.0
    %95 = vmatpush1.msra.mxu0 0.0
    %96 = vmatprep.subr.mxu0 0.0
    %97 = vmatpush1.msra.mxu0 0.0
    %98 = vmatprep.subr.mxu0 0.0
    %99 = vmatpush1.msra.mxu0 0.0
    %100 = vmatprep.subr.mxu0 0.0
    %101 = vmatpush1.msra.mxu0 0.0
    %102 = vmatprep.subr.mxu0 0.0
    %103 = vmatpush1.msra.mxu0 0.0
    %104 = vmatprep.subr.mxu0 0.0
    %105 = vmatpush1.msra.mxu0 0.0
    %106 = vmatprep.subr.mxu0 0.0
    %107 = vmatpush1.msra.mxu0 0.0
    %108 = vmatprep.subr.mxu0 0.0
    %109 = vmatpush1.msra.mxu0 0.0
    %110 = vmatprep.subr.mxu0 0.0
    %111 = vmatpush1.msra.mxu0 0.0
    %112 = vmatprep.subr.mxu0 0.0
    %113 = vmatpush1.msra.mxu0 0.0
    %114 = vmatprep.subr.mxu0 0.0
    %115 = vmatpush1.msra.mxu0 0.0
    %116 = vmatprep.subr.mxu0 0.0
    %117 = vmatpush1.msra.mxu0 0.0
    %118 = vmatprep.subr.mxu0 0.0
    %119 = vmatpush1.msra.mxu0 0.0
    %120 = vmatprep.subr.mxu0 0.0
    %121 = vmatpush1.msra.mxu0 0.0
    %122 = vmatprep.subr.mxu0 0.0
    %123 = vmatpush1.msra.mxu0 0.0
    %124 = vmatprep.subr.mxu0 0.0
    %125 = vmatpush1.msra.mxu0 0.0
    %126 = vmatprep.subr.mxu0 0.0
    %127 = vmatpush1.msra.mxu0 0.0
    %128 = vmatprep.subr.mxu0 0.0
    %129 = vmatpush1.msra.mxu0 0.0
    %130 = vmatprep.subr.mxu0 0.0
    %131 = vmatpush1.msra.mxu0 0.0
    %132 = vmatprep.subr.mxu0 0.0
    %133 = vmatpush1.msra.mxu0 0.0
    %134 = vmatprep.subr.mxu0 0.0
    %135 = vmatpush1.msra.mxu0 0.0
    %136 = vmatprep.subr.mxu0 0.0
    %137 = vmatpush1.msra.mxu0 0.0
    %138 = vmatprep.subr.mxu0 0.0
    %139 = vmatpush1.msra.mxu0 0.0
    %140 = vmatprep.mubr.f32.mxu0 0.0
    %141 = vmatmul.mubr.f32.gmra.mrb[0].mxu0 %v66
    %v142 = vpop.f32.mrb[0].mxu0
    %v143 = vadd.f32 %v55, %v142
    %v144 = vpop.f32.mrb[0].mxu0
    %v145 = vadd.f32 %v55, %v144
    %146 = vmatprep.mubr.f32.mxu0 0.0
    %147 = vmatmul.mubr.f32.gmra.mrb[0].mxu0 %v69
    %v148 = vpop.f32.mrb[0].mxu0
    %v149 = vadd.f32 %v60, %v148
    %v150 = vpop.f32.mrb[0].mxu0
    %v151 = vadd.f32 %v60, %v150
    %152 = vdwg.mxu0
    %v153 = vmax.f32 %v143, 0.0
    %v154 = vmax.f32 %v145, 0.0
    %v155 = vmax.f32 %v149, 0.0
    %v156 = vmax.f32 %v151, 0.0
    %v157 = vld [vmem:[%s4] sm:$0xff]
    %v158 = vld [vmem:[%s4 + $0x8] sm:$0xf]
    %159 = vrot.lane.b32.xlu0 %v153, 17
    %v160 = vpop.permute.xlu0 %159
    %161 = vrot.lane.b32.xlu0 %v155, 17
    %v162 = vpop.permute.xlu0 %161
    %163 = vrot.lane.b32.xlu0 %v154, 17
    %v164 = vpop.permute.xlu0 %163
    %165 = vrot.lane.b32.xlu0 %v156, 17
    %v166 = vpop.permute.xlu0 %165
    %v167 = vlaneseq
    %v168 = vand.u32 %v167, 127
    %vm169 = vcmp.lt.s32.totalorder %v168, 17
    %v170 = vsel %vm169, %v160, %v164
    %v171 = vsel %vm169, %v162, %v166
    %v172 = vsel %vm169, %v164, %v160
    %v173 = vsel %vm169, %v166, %v162
    %v174 = vld [vmem:[%s8] ss:$8 sm:$0x3]
    %v176 = vlaneseq
    %v177 = vshrl.u32 %v176, 7
    %v178 = vsub.s32 0, %v177
    %v179 = vrot.slane %v174, %v178
    %v180 = vlaneseq
    %v181 = vshrl.u32 %v180, 7
    %v182 = vsub.s32 1, %v181
    %v183 = vrot.slane %v174, %v182
    %v186 = vmul.f32 %v172, %v179
    %v187 = vmul.f32 %v170, %v183
    %v188 = vmul.f32 %v173, %v179
    %v189 = vmul.f32 %v171, %v183
    %191 = vset.pattern.permute.xlu0 0
    %192 = vperm.xlu0 %191, %v157
    %v193 = vpop.permute.xlu0 %192
    %196 = vset.pattern.permute.xlu0 0
    %197 = vperm.xlu0 %196, %v158
    %v198 = vpop.permute.xlu0 %197
    %v200 = vmul.f32 %v186, %v193
    %v201 = vmul.f32 %v187, %v193
    %v202 = vmul.f32 %v188, %v198
    %v203 = vmul.f32 %v189, %v198
    %v204 = vadd.f32 %v200, 0.0
    %v205 = vadd.f32 %v201, 0.0
    %v206 = vadd.f32 %v202, 0.0
    %v207 = vadd.f32 %v203, 0.0
    %208 = vrot.lane.b32.xlu0 %v153, 16
    %v209 = vpop.permute.xlu0 %208
    %210 = vrot.lane.b32.xlu0 %v155, 16
    %v211 = vpop.permute.xlu0 %210
    %212 = vrot.lane.b32.xlu0 %v154, 16
    %v213 = vpop.permute.xlu0 %212
    %214 = vrot.lane.b32.xlu0 %v156, 16
    %v215 = vpop.permute.xlu0 %214
    %vm216 = vcmp.lt.s32.totalorder %v168, 16
    %v217 = vsel %vm216, %v209, %v213
    %v218 = vsel %vm216, %v211, %v215
    %v219 = vsel %vm216, %v213, %v209
    %v220 = vsel %vm216, %v215, %v211
    %s221 = scalar_lea.vmem %s8, 1
    %v222 = vld [vmem:[%s221] ss:$8 sm:$0x3]
    %v224 = vlaneseq
    %v225 = vshrl.u32 %v224, 7
    %v226 = vsub.s32 0, %v225
    %v227 = vrot.slane %v222, %v226
    %v228 = vlaneseq
    %v229 = vshrl.u32 %v228, 7
    %v230 = vsub.s32 1, %v229
    %v231 = vrot.slane %v222, %v230
    %v234 = vmul.f32 %v219, %v227
    %v235 = vmul.f32 %v217, %v231
    %v236 = vmul.f32 %v220, %v227
    %v237 = vmul.f32 %v218, %v231
    %238 = vset.pattern.permute.xlu0 1
    %239 = vperm.xlu0 %238, %v157
    %v240 = vpop.permute.xlu0 %239
    %242 = vset.pattern.permute.xlu0 1
    %243 = vperm.xlu0 %242, %v158
    %v244 = vpop.permute.xlu0 %243
    %v246 = vmul.f32 %v234, %v240
    %v247 = vmul.f32 %v235, %v240
    %v248 = vmul.f32 %v236, %v244
    %v249 = vmul.f32 %v237, %v244
    %v250 = vadd.f32 %v204, %v246
    %v251 = vadd.f32 %v205, %v247
    %v252 = vadd.f32 %v206, %v248
    %v253 = vadd.f32 %v207, %v249
    %254 = vrot.lane.b32.xlu0 %v153, 15
    %v255 = vpop.permute.xlu0 %254
    %256 = vrot.lane.b32.xlu0 %v155, 15
    %v257 = vpop.permute.xlu0 %256
    %258 = vrot.lane.b32.xlu0 %v154, 15
    %v259 = vpop.permute.xlu0 %258
    %260 = vrot.lane.b32.xlu0 %v156, 15
    %v261 = vpop.permute.xlu0 %260
    %vm262 = vcmp.lt.s32.totalorder %v168, 15
    %v263 = vsel %vm262, %v255, %v259
    %v264 = vsel %vm262, %v257, %v261
    %v265 = vsel %vm262, %v259, %v255
    %v266 = vsel %vm262, %v261, %v257
    %s267 = scalar_lea.vmem %s8, 2
    %v268 = vld [vmem:[%s267] ss:$8 sm:$0x3]
    %v270 = vlaneseq
    %v271 = vshrl.u32 %v270, 7
    %v272 = vsub.s32 0, %v271
    %v273 = vrot.slane %v268, %v272
    %v274 = vlaneseq
    %v275 = vshrl.u32 %v274, 7
    %v276 = vsub.s32 1, %v275
    %v277 = vrot.slane %v268, %v276
    %v280 = vmul.f32 %v265, %v273
    %v281 = vmul.f32 %v263, %v277
    %v282 = vmul.f32 %v266, %v273
    %v283 = vmul.f32 %v264, %v277
    %284 = vset.pattern.permute.xlu0 2
    %285 = vperm.xlu0 %284, %v157
    %v286 = vpop.permute.xlu0 %285
    %288 = vset.pattern.permute.xlu0 2
    %289 = vperm.xlu0 %288, %v158
    %v290 = vpop.permute.xlu0 %289
    %v292 = vmul.f32 %v280, %v286
    %v293 = vmul.f32 %v281, %v286
    %v294 = vmul.f32 %v282, %v290
    %v295 = vmul.f32 %v283, %v290
    %v296 = vadd.f32 %v250, %v292
    %v297 = vadd.f32 %v251, %v293
    %v298 = vadd.f32 %v252, %v294
    %v299 = vadd.f32 %v253, %v295
    %300 = vrot.lane.b32.xlu0 %v153, 1
    %v301 = vpop.permute.xlu0 %300
    %302 = vrot.lane.b32.xlu0 %v155, 1
    %v303 = vpop.permute.xlu0 %302
    %304 = vrot.lane.b32.xlu0 %v154, 1
    %v305 = vpop.permute.xlu0 %304
    %306 = vrot.lane.b32.xlu0 %v156, 1
    %v307 = vpop.permute.xlu0 %306
    %vm308 = vcmp.lt.s32.totalorder %v168, 1
    %v309 = vsel %vm308, %v301, %v305
    %v310 = vsel %vm308, %v303, %v307
    %v311 = vsel %vm308, %v305, %v301
    %v312 = vsel %vm308, %v307, %v303
    %s313 = scalar_lea.vmem %s8, 3
    %v314 = vld [vmem:[%s313] ss:$8 sm:$0x3]
    %v316 = vlaneseq
    %v317 = vshrl.u32 %v316, 7
    %v318 = vsub.s32 0, %v317
    %v319 = vrot.slane %v314, %v318
    %v320 = vlaneseq
    %v321 = vshrl.u32 %v320, 7
    %v322 = vsub.s32 1, %v321
    %v323 = vrot.slane %v314, %v322
    %v326 = vmul.f32 %v311, %v319
    %v327 = vmul.f32 %v309, %v323
    %v328 = vmul.f32 %v312, %v319
    %v329 = vmul.f32 %v310, %v323
    %330 = vset.pattern.permute.xlu0 3
    %331 = vperm.xlu0 %330, %v157
    %v332 = vpop.permute.xlu0 %331
    %334 = vset.pattern.permute.xlu0 3
    %335 = vperm.xlu0 %334, %v158
    %v336 = vpop.permute.xlu0 %335
    %v338 = vmul.f32 %v326, %v332
    %v339 = vmul.f32 %v327, %v332
    %v340 = vmul.f32 %v328, %v336
    %v341 = vmul.f32 %v329, %v336
    %v342 = vadd.f32 %v296, %v338
    %v343 = vadd.f32 %v297, %v339
    %v344 = vadd.f32 %v298, %v340
    %v345 = vadd.f32 %v299, %v341
    %s346 = scalar_lea.vmem %s8, 4
    %v347 = vld [vmem:[%s346] ss:$8 sm:$0x3]
    %v349 = vlaneseq
    %v350 = vshrl.u32 %v349, 7
    %v351 = vsub.s32 0, %v350
    %v352 = vrot.slane %v347, %v351
    %v353 = vlaneseq
    %v354 = vshrl.u32 %v353, 7
    %v355 = vsub.s32 1, %v354
    %v356 = vrot.slane %v347, %v355
    %v359 = vmul.f32 %v153, %v352
    %v360 = vmul.f32 %v154, %v356
    %v361 = vmul.f32 %v155, %v352
    %v362 = vmul.f32 %v156, %v356
    %363 = vset.pattern.permute.xlu0 4
    %364 = vperm.xlu0 %363, %v157
    %v365 = vpop.permute.xlu0 %364
    %367 = vset.pattern.permute.xlu0 4
    %368 = vperm.xlu0 %367, %v158
    %v369 = vpop.permute.xlu0 %368
    %v371 = vmul.f32 %v359, %v365
    %v372 = vmul.f32 %v360, %v365
    %v373 = vmul.f32 %v361, %v369
    %v374 = vmul.f32 %v362, %v369
    %v375 = vadd.f32 %v342, %v371
    %v376 = vadd.f32 %v343, %v372
    %v377 = vadd.f32 %v344, %v373
    %v378 = vadd.f32 %v345, %v374
    %379 = vrot.lane.b32.xlu0 %v153, 127
    %v380 = vpop.permute.xlu0 %379
    %381 = vrot.lane.b32.xlu0 %v155, 127
    %v382 = vpop.permute.xlu0 %381
    %383 = vrot.lane.b32.xlu0 %v154, 127
    %v384 = vpop.permute.xlu0 %383
    %385 = vrot.lane.b32.xlu0 %v156, 127
    %v386 = vpop.permute.xlu0 %385
    %vm387 = vcmp.lt.s32.totalorder %v168, 127
    %v388 = vsel %vm387, %v380, %v384
    %v389 = vsel %vm387, %v382, %v386
    %v390 = vsel %vm387, %v384, %v380
    %v391 = vsel %vm387, %v386, %v382
    %s392 = scalar_lea.vmem %s8, 5
    %v393 = vld [vmem:[%s392] ss:$8 sm:$0x3]
    %v395 = vlaneseq
    %v396 = vshrl.u32 %v395, 7
    %v397 = vsub.s32 0, %v396
    %v398 = vrot.slane %v393, %v397
    %v399 = vlaneseq
    %v400 = vshrl.u32 %v399, 7
    %v401 = vsub.s32 1, %v400
    %v402 = vrot.slane %v393, %v401
    %v405 = vmul.f32 %v388, %v398
    %v406 = vmul.f32 %v390, %v402
    %v407 = vmul.f32 %v389, %v398
    %v408 = vmul.f32 %v391, %v402
    %409 = vset.pattern.permute.xlu0 5
    %410 = vperm.xlu0 %409, %v157
    %v411 = vpop.permute.xlu0 %410
    %413 = vset.pattern.permute.xlu0 5
    %414 = vperm.xlu0 %413, %v158
    %v415 = vpop.permute.xlu0 %414
    %v417 = vmul.f32 %v405, %v411
    %v418 = vmul.f32 %v406, %v411
    %v419 = vmul.f32 %v407, %v415
    %v420 = vmul.f32 %v408, %v415
    %v421 = vadd.f32 %v375, %v417
    %v422 = vadd.f32 %v376, %v418
    %v423 = vadd.f32 %v377, %v419
    %v424 = vadd.f32 %v378, %v420
    %425 = vrot.lane.b32.xlu0 %v153, 113
    %v426 = vpop.permute.xlu0 %425
    %427 = vrot.lane.b32.xlu0 %v155, 113
    %v428 = vpop.permute.xlu0 %427
    %429 = vrot.lane.b32.xlu0 %v154, 113
    %v430 = vpop.permute.xlu0 %429
    %431 = vrot.lane.b32.xlu0 %v156, 113
    %v432 = vpop.permute.xlu0 %431
    %vm433 = vcmp.lt.s32.totalorder %v168, 113
    %v434 = vsel %vm433, %v426, %v430
    %v435 = vsel %vm433, %v428, %v432
    %v436 = vsel %vm433, %v430, %v426
    %v437 = vsel %vm433, %v432, %v428
    %s438 = scalar_lea.vmem %s8, 6
    %v439 = vld [vmem:[%s438] ss:$8 sm:$0x3]
    %v441 = vlaneseq
    %v442 = vshrl.u32 %v441, 7
    %v443 = vsub.s32 0, %v442
    %v444 = vrot.slane %v439, %v443
    %v445 = vlaneseq
    %v446 = vshrl.u32 %v445, 7
    %v447 = vsub.s32 1, %v446
    %v448 = vrot.slane %v439, %v447
    %v451 = vmul.f32 %v434, %v444
    %v452 = vmul.f32 %v436, %v448
    %v453 = vmul.f32 %v435, %v444
    %v454 = vmul.f32 %v437, %v448
    %455 = vset.pattern.permute.xlu0 6
    %456 = vperm.xlu0 %455, %v157
    %v457 = vpop.permute.xlu0 %456
    %459 = vset.pattern.permute.xlu0 6
    %460 = vperm.xlu0 %459, %v158
    %v461 = vpop.permute.xlu0 %460
    %v463 = vmul.f32 %v451, %v457
    %v464 = vmul.f32 %v452, %v457
    %v465 = vmul.f32 %v453, %v461
    %v466 = vmul.f32 %v454, %v461
    %v467 = vadd.f32 %v421, %v463
    %v468 = vadd.f32 %v422, %v464
    %v469 = vadd.f32 %v423, %v465
    %v470 = vadd.f32 %v424, %v466
    %471 = vrot.lane.b32.xlu0 %v153, 112
    %v472 = vpop.permute.xlu0 %471
    %473 = vrot.lane.b32.xlu0 %v155, 112
    %v474 = vpop.permute.xlu0 %473
    %475 = vrot.lane.b32.xlu0 %v154, 112
    %v476 = vpop.permute.xlu0 %475
    %477 = vrot.lane.b32.xlu0 %v156, 112
    %v478 = vpop.permute.xlu0 %477
    %vm479 = vcmp.lt.s32.totalorder %v168, 112
    %v480 = vsel %vm479, %v472, %v476
    %v481 = vsel %vm479, %v474, %v478
    %v482 = vsel %vm479, %v476, %v472
    %v483 = vsel %vm479, %v478, %v474
    %s484 = scalar_lea.vmem %s8, 7
    %v485 = vld [vmem:[%s484] ss:$8 sm:$0x3]
    %v487 = vlaneseq
    %v488 = vshrl.u32 %v487, 7
    %v489 = vsub.s32 0, %v488
    %v490 = vrot.slane %v485, %v489
    %v491 = vlaneseq
    %v492 = vshrl.u32 %v491, 7
    %v493 = vsub.s32 1, %v492
    %v494 = vrot.slane %v485, %v493
    %v497 = vmul.f32 %v480, %v490
    %v498 = vmul.f32 %v482, %v494
    %v499 = vmul.f32 %v481, %v490
    %v500 = vmul.f32 %v483, %v494
    %501 = vset.pattern.permute.xlu0 7
    %502 = vperm.xlu0 %501, %v157
    %v503 = vpop.permute.xlu0 %502
    %505 = vset.pattern.permute.xlu0 7
    %506 = vperm.xlu0 %505, %v158
    %v507 = vpop.permute.xlu0 %506
    %v509 = vmul.f32 %v497, %v503
    %v510 = vmul.f32 %v498, %v503
    %v511 = vmul.f32 %v499, %v507
    %v512 = vmul.f32 %v500, %v507
    %v513 = vadd.f32 %v467, %v509
    %v514 = vadd.f32 %v468, %v510
    %v515 = vadd.f32 %v469, %v511
    %v516 = vadd.f32 %v470, %v512
    %517 = vrot.lane.b32.xlu0 %v153, 111
    %v518 = vpop.permute.xlu0 %517
    %519 = vrot.lane.b32.xlu0 %v155, 111
    %v520 = vpop.permute.xlu0 %519
    %521 = vrot.lane.b32.xlu0 %v154, 111
    %v522 = vpop.permute.xlu0 %521
    %523 = vrot.lane.b32.xlu0 %v156, 111
    %v524 = vpop.permute.xlu0 %523
    %vm525 = vcmp.lt.s32.totalorder %v168, 111
    %v526 = vsel %vm525, %v518, %v522
    %v527 = vsel %vm525, %v520, %v524
    %v528 = vsel %vm525, %v522, %v518
    %v529 = vsel %vm525, %v524, %v520
    %s530 = scalar_lea.vmem %s8, 16
    %v531 = vld [vmem:[%s530] ss:$8 sm:$0x3]
    %v533 = vlaneseq
    %v534 = vshrl.u32 %v533, 7
    %v535 = vsub.s32 0, %v534
    %v536 = vrot.slane %v531, %v535
    %v537 = vlaneseq
    %v538 = vshrl.u32 %v537, 7
    %v539 = vsub.s32 1, %v538
    %v540 = vrot.slane %v531, %v539
    %v543 = vmul.f32 %v526, %v536
    %v544 = vmul.f32 %v528, %v540
    %v545 = vmul.f32 %v527, %v536
    %v546 = vmul.f32 %v529, %v540
    %547 = vset.pattern.permute.xlu0 8
    %548 = vperm.xlu0 %547, %v157
    %v549 = vpop.permute.xlu0 %548
    %551 = vset.pattern.permute.xlu0 8
    %552 = vperm.xlu0 %551, %v158
    %v553 = vpop.permute.xlu0 %552
    %v555 = vmul.f32 %v543, %v549
    %v556 = vmul.f32 %v544, %v549
    %v557 = vmul.f32 %v545, %v553
    %v558 = vmul.f32 %v546, %v553
    %v559 = vadd.f32 %v513, %v555
    %v560 = vadd.f32 %v514, %v556
    %v561 = vadd.f32 %v515, %v557
    %v562 = vadd.f32 %v516, %v558
    %v563 = vld [vmem:[%s5] sm:$0xff]
    %v564 = vld [vmem:[%s5 + $0x8] sm:$0xf]
    %566 = vset.pattern.permute.xlu0 0
    %567 = vperm.xlu0 %566, %v563
    %v568 = vpop.permute.xlu0 %567
    %571 = vset.pattern.permute.xlu0 0
    %572 = vperm.xlu0 %571, %v564
    %v573 = vpop.permute.xlu0 %572
    %v575 = vadd.f32 %v559, %v568
    %v576 = vadd.f32 %v560, %v568
    %v577 = vadd.f32 %v561, %v573
    %v578 = vadd.f32 %v562, %v573
    %v579 = vld [vmem:[%s6] sm:$0xff]
    %v580 = vld [vmem:[%s6 + $0x8] sm:$0xf]
    %v581 = vld [vmem:[%s7] sm:$0xff]
    %v582 = vld [vmem:[%s7 + $0x8] sm:$0xf]
    %584 = vset.pattern.permute.xlu0 0
    %585 = vperm.xlu0 %584, %v581
    %v586 = vpop.permute.xlu0 %585
    %589 = vset.pattern.permute.xlu0 0
    %590 = vperm.xlu0 %589, %v582
    %v591 = vpop.permute.xlu0 %590
    %vm593 = vcmask 97280
    %v595 = vsel %vm593, %v579, 0
    %v598 = vsel %vm593, %v580, 0
    %v601 = vsel %vm71, %v577, 0
    %v604 = vsel %vm71, %v578, 0
    %606 = vmatprep.subr.mxu0 %v576
    %607 = vmatpush1.msra.mxu0 %v575
    %608 = vmatprep.subr.mxu0 %v604
    %609 = vmatpush1.msra.mxu0 %v601
    %610 = vmatprep.subr.mxu0 0.0
    %611 = vmatpush1.msra.mxu0 0.0
    %612 = vmatprep.subr.mxu0 0.0
    %613 = vmatpush1.msra.mxu0 0.0
    %614 = vmatprep.subr.mxu0 0.0
    %615 = vmatpush1.msra.mxu0 0.0
    %616 = vmatprep.subr.mxu0 0.0
    %617 = vmatpush1.msra.mxu0 0.0
    %618 = vmatprep.subr.mxu0 0.0
    %619 = vmatpush1.msra.mxu0 0.0
    %620 = vmatprep.subr.mxu0 0.0
    %621 = vmatpush1.msra.mxu0 0.0
    %622 = vmatprep.subr.mxu0 0.0
    %623 = vmatpush1.msra.mxu0 0.0
    %624 = vmatprep.subr.mxu0 0.0
    %625 = vmatpush1.msra.mxu0 0.0
    %626 = vmatprep.subr.mxu0 0.0
    %627 = vmatpush1.msra.mxu0 0.0
    %628 = vmatprep.subr.mxu0 0.0
    %629 = vmatpush1.msra.mxu0 0.0
    %630 = vmatprep.subr.mxu0 0.0
    %631 = vmatpush1.msra.mxu0 0.0
    %632 = vmatprep.subr.mxu0 0.0
    %633 = vmatpush1.msra.mxu0 0.0
    %634 = vmatprep.subr.mxu0 0.0
    %635 = vmatpush1.msra.mxu0 0.0
    %636 = vmatprep.subr.mxu0 0.0
    %637 = vmatpush1.msra.mxu0 0.0
    %638 = vmatprep.subr.mxu0 0.0
    %639 = vmatpush1.msra.mxu0 0.0
    %640 = vmatprep.subr.mxu0 0.0
    %641 = vmatpush1.msra.mxu0 0.0
    %642 = vmatprep.subr.mxu0 0.0
    %643 = vmatpush1.msra.mxu0 0.0
    %644 = vmatprep.subr.mxu0 0.0
    %645 = vmatpush1.msra.mxu0 0.0
    %646 = vmatprep.subr.mxu0 0.0
    %647 = vmatpush1.msra.mxu0 0.0
    %648 = vmatprep.subr.mxu0 0.0
    %649 = vmatpush1.msra.mxu0 0.0
    %650 = vmatprep.subr.mxu0 0.0
    %651 = vmatpush1.msra.mxu0 0.0
    %652 = vmatprep.subr.mxu0 0.0
    %653 = vmatpush1.msra.mxu0 0.0
    %654 = vmatprep.subr.mxu0 0.0
    %655 = vmatpush1.msra.mxu0 0.0
    %656 = vmatprep.subr.mxu0 0.0
    %657 = vmatpush1.msra.mxu0 0.0
    %658 = vmatprep.subr.mxu0 0.0
    %659 = vmatpush1.msra.mxu0 0.0
    %660 = vmatprep.subr.mxu0 0.0
    %661 = vmatpush1.msra.mxu0 0.0
    %662 = vmatprep.subr.mxu0 0.0
    %663 = vmatpush1.msra.mxu0 0.0
    %664 = vmatprep.subr.mxu0 0.0
    %665 = vmatpush1.msra.mxu0 0.0
    %666 = vmatprep.subr.mxu0 0.0
    %667 = vmatpush1.msra.mxu0 0.0
    %668 = vmatprep.subr.mxu0 0.0
    %669 = vmatpush1.msra.mxu0 0.0
    %670 = vmatprep.mubr.f32.mxu0 0.0
    %671 = vmatmul.mubr.f32.gmra.mrb[0].mxu0 %v595
    %v672 = vpop.f32.mrb[0].mxu0
    %v673 = vadd.f32 %v586, %v672
    %v674 = vpop.f32.mrb[0].mxu0
    %v675 = vadd.f32 %v586, %v674
    %676 = vmatprep.mubr.f32.mxu0 0.0
    %677 = vmatmul.mubr.f32.gmra.mrb[0].mxu0 %v598
    %v678 = vpop.f32.mrb[0].mxu0
    %v679 = vadd.f32 %v591, %v678
    %v680 = vpop.f32.mrb[0].mxu0
    %v681 = vadd.f32 %v591, %v680
    %682 = vdwg.mxu0
    %v683 = vmax.f32 %v673, 0.0
    %v684 = vmax.f32 %v675, 0.0
    %v685 = vmax.f32 %v679, 0.0
    %v686 = vmax.f32 %v681, 0.0
    %v687 = vld [vmem:[#allocation2] ss:$2 sm:$0x3]
    %v688 = vlaneseq
    %vm689 = vcmp.ge.s32.totalorder %v688, 0
    %vm690 = vcmp.lt.s32.totalorder %v688, 256
    %vm691 = vmand %vm689, %vm690
    %692 = vst.msk [vmem:[#allocation5] ss:$8 sm:$0x3] %vm691, %v687
    %693 = vst.msk [vmem:[#allocation5] ss:$8 sm:$0x0] %vm691, %v687
    %s694 = scalar_lea.vmem [#allocation2], 1
    %v695 = vld [vmem:[%s694] ss:$2 sm:$0x3]
    %s696 = scalar_lea.vmem [#allocation5], 2
    %697 = vst.msk [vmem:[%s696] ss:$8 sm:$0x3] %vm691, %v695
    %698 = vst.msk [vmem:[%s696] ss:$8 sm:$0x0] %vm691, %v695
    %v701 = vcombine.low %v683, %v684
    %v703 = vunpack.c.l.s4 1966171168
    %v704 = vunpack.c.0.s8 %v703
    %v705 = vlaneseq
    %v706 = vshrl.u32 %v705, 7
    %v707 = vsub.s32 %v704, %v706
    %v708 = vrot.slane %v701, %v707
    %v710 = vunpack.c.l.s4 1966171168
    %v711 = vunpack.c.0.s8 %v710
    %v712 = vlaneseq
    %v713 = vshrl.u32 %v712, 7
    %v714 = vsub.s32 %v711, %v713
    %v715 = vrot.slane %v708, %v714
    %s717 = scalar_lea.vmem [#allocation5], 4
    %718 = vst.msk [vmem:[%s717] ss:$8 sm:$0x3] %vm691, %v715
    %719 = vst.msk [vmem:[%s717] ss:$8 sm:$0x0] %vm691, %v715
    %v720 = vcombine.high %v708, %v708
    %v722 = vunpack.c.l.s4 1966171168
    %v723 = vunpack.c.0.s8 %v722
    %v724 = vlaneseq
    %v725 = vshrl.u32 %v724, 7
    %v726 = vsub.s32 %v723, %v725
    %v727 = vrot.slane %v720, %v726
    %s729 = scalar_lea.vmem [#allocation5], 6
    %730 = vst.msk [vmem:[%s729] ss:$8 sm:$0x3] %vm691, %v727
    %731 = vst.msk [vmem:[%s729] ss:$8 sm:$0x0] %vm691, %v727
    %v732 = vcombine.high %v715, %v715
    %s734 = scalar_lea.vmem [#allocation5], 1
    %735 = vst.msk [vmem:[%s734] ss:$8 sm:$0x3] %vm691, %v732
    %736 = vst.msk [vmem:[%s734] ss:$8 sm:$0x0] %vm691, %v732
    %v737 = vcombine.high %v727, %v727
    %s739 = scalar_lea.vmem [#allocation5], 3
    %740 = vst.msk [vmem:[%s739] ss:$8 sm:$0x3] %vm691, %v737
    %741 = vst.msk [vmem:[%s739] ss:$8 sm:$0x0] %vm691, %v737
    %v742 = vcombine.high %v683, %v684
    %v744 = vunpack.c.l.s4 1966171168
    %v745 = vunpack.c.0.s8 %v744
    %v746 = vlaneseq
    %v747 = vshrl.u32 %v746, 7
    %v748 = vsub.s32 %v745, %v747
    %v749 = vrot.slane %v742, %v748
    %v751 = vunpack.c.l.s4 1966171168
    %v752 = vunpack.c.0.s8 %v751
    %v753 = vlaneseq
    %v754 = vshrl.u32 %v753, 7
    %v755 = vsub.s32 %v752, %v754
    %v756 = vrot.slane %v749, %v755
    %s758 = scalar_lea.vmem [#allocation5], 5
    %759 = vst.msk [vmem:[%s758] ss:$8 sm:$0x3] %vm691, %v756
    %760 = vst.msk [vmem:[%s758] ss:$8 sm:$0x0] %vm691, %v756
    %v761 = vcombine.high %v749, %v749
    %v763 = vunpack.c.l.s4 1966171168
    %v764 = vunpack.c.0.s8 %v763
    %v765 = vlaneseq
    %v766 = vshrl.u32 %v765, 7
    %v767 = vsub.s32 %v764, %v766
    %v768 = vrot.slane %v761, %v767
    %s770 = scalar_lea.vmem [#allocation5], 7
    %771 = vst.msk [vmem:[%s770] ss:$8 sm:$0x3] %vm691, %v768
    %772 = vst.msk [vmem:[%s770] ss:$8 sm:$0x0] %vm691, %v768
    %s773 = scalar_lea.vmem [#allocation2], 4
    %v774 = vld [vmem:[%s773] ss:$2 sm:$0x3]
    %s775 = scalar_lea.vmem [#allocation5], 16
    %776 = vst.msk [vmem:[%s775] ss:$8 sm:$0x3] %vm691, %v774
    %777 = vst.msk [vmem:[%s775] ss:$8 sm:$0x0] %vm691, %v774
    %s778 = scalar_lea.vmem %s773, 1 [#allocation2]
    %v779 = vld [vmem:[%s778] ss:$2 sm:$0x3]
    %s780 = scalar_lea.vmem %s775, 2 [#allocation5]
    %781 = vst.msk [vmem:[%s780] ss:$8 sm:$0x3] %vm691, %v779
    %782 = vst.msk [vmem:[%s780] ss:$8 sm:$0x0] %vm691, %v779
    %v783 = vcombine.high %v756, %v756
    %s785 = scalar_lea.vmem %s775, 4 [#allocation5]
    %786 = vst.msk [vmem:[%s785] ss:$8 sm:$0x3] %vm691, %v783
    %787 = vst.msk [vmem:[%s785] ss:$8 sm:$0x0] %vm691, %v783
    %v788 = vcombine.high %v768, %v768
    %s790 = scalar_lea.vmem %s775, 6 [#allocation5]
    %791 = vst.msk [vmem:[%s790] ss:$8 sm:$0x3] %vm691, %v788
    %792 = vst.msk [vmem:[%s790] ss:$8 sm:$0x0] %vm691, %v788
    %v795 = vcombine.low %v685, %v686
    %v797 = vunpack.c.l.s4 1966171168
    %v798 = vunpack.c.0.s8 %v797
    %v799 = vlaneseq
    %v800 = vshrl.u32 %v799, 7
    %v801 = vsub.s32 %v798, %v800
    %v802 = vrot.slane %v795, %v801
    %v804 = vunpack.c.l.s4 1966171168
    %v805 = vunpack.c.0.s8 %v804
    %v806 = vlaneseq
    %v807 = vshrl.u32 %v806, 7
    %v808 = vsub.s32 %v805, %v807
    %v809 = vrot.slane %v802, %v808
    %s811 = scalar_lea.vmem %s775, 1 [#allocation5]
    %812 = vst.msk [vmem:[%s811] ss:$8 sm:$0x3] %vm691, %v809
    %813 = vst.msk [vmem:[%s811] ss:$8 sm:$0x0] %vm691, %v809
    %v814 = vcombine.high %v802, %v802
    %v816 = vunpack.c.l.s4 1966171168
    %v817 = vunpack.c.0.s8 %v816
    %v818 = vlaneseq
    %v819 = vshrl.u32 %v818, 7
    %v820 = vsub.s32 %v817, %v819
    %v821 = vrot.slane %v814, %v820
    %s823 = scalar_lea.vmem %s775, 3 [#allocation5]
    %824 = vst.msk [vmem:[%s823] ss:$8 sm:$0x3] %vm691, %v821
    %825 = vst.msk [vmem:[%s823] ss:$8 sm:$0x0] %vm691, %v821
    %v826 = vcombine.high %v809, %v809
    %s828 = scalar_lea.vmem %s775, 5 [#allocation5]
    %829 = vst.msk [vmem:[%s828] ss:$8 sm:$0x3] %vm691, %v826
    %830 = vst.msk [vmem:[%s828] ss:$8 sm:$0x0] %vm691, %v826
    %v831 = vcombine.high %v821, %v821
    %s833 = scalar_lea.vmem %s775, 7 [#allocation5]
    %834 = vst.msk [vmem:[%s833] ss:$8 sm:$0x3] %vm691, %v831
    %835 = vst.msk [vmem:[%s833] ss:$8 sm:$0x0] %vm691, %v831
    // Predicated region
    $region42: #{tpu_custom_call.1} parent=1 // pred_check
      _
    $region43: #{tpu_custom_call.1} parent=1 // pred_check_branch
      %837 = sbr.rel (0) target = $region45
    $region44: #{tpu_custom_call.1} parent=1 // pred_region
      %s839 = ssub.s32 512, 512
      %840 = vsyncadd [#allocation4], %s839
      %s841 = sshll.u32 [#allocation5], 4
      %s842 = int_to_ptr.vmem [resolvable:$true] %s841
      %847 = dma.vmem_to_hbm [thread:$0]  %s842, 512, %s9, [#allocation4], 256, 256, 16
    $region45: #{tpu_custom_call.1} parent=1 // pred_fallthru
      _
    // Predicated region
    $region46: #{tpu_custom_call.1} parent=1 // pred_check
      _
    $region47: #{tpu_custom_call.1} parent=1 // pred_check_branch
      %849 = sbr.rel (0) target = $region49
    $region48: #{tpu_custom_call.1} parent=1 // pred_region
      %850 = dma.done [#allocation4], 512
    $region49: #{tpu_custom_call.1} parent=1 // pred_fallthru
      _
    %851 = vsyncpa [#allocation3], 1
    %852 = vsyncpa [#allocation4], 1

</llo_original>
